<compile_context>
chip_gen: v5e
topology: v5e:2x2
jax: 0.10.0
libtpu: 0.0.40
codegen_flags: <defaults>
</compile_context>

<pallas_src>
import functools

import jax
import jax.numpy as jnp
from jax.experimental import pallas as pl
from jax.experimental.pallas import tpu as pltpu


# ---------------------------------------------------------------------------
# Pallas kernels (elementwise hot paths; compute in f32, store in input dtype)
# ---------------------------------------------------------------------------

def _square_kernel(x_ref, o_ref):
    x = x_ref[...].astype(jnp.float32)
    o_ref[...] = (x * x).astype(o_ref.dtype)


def _safe_log_kernel(x_ref, o_ref, *, eps):
    x = x_ref[...].astype(jnp.float32)
    o_ref[...] = jnp.log(jnp.maximum(x, eps)).astype(o_ref.dtype)


def _square_safe_log_kernel(x_ref, o_ref, *, eps):
    # Fused square -> safe_log: one HBM read + one HBM write instead of two of
    # each; the extra VPU mul and EUP log use otherwise-idle VLIW slots.
    x = x_ref[...].astype(jnp.float32)
    o_ref[...] = jnp.log(jnp.maximum(x * x, eps)).astype(o_ref.dtype)


# ---------------------------------------------------------------------------
# Layout / tiling selection
# ---------------------------------------------------------------------------

_LANE_CANDIDATES = (4096, 2048, 1024, 512, 256, 128)
# ~2 MiB per block; with double-buffering of one input + one output that is
# ~8 MiB of VMEM, well inside the scoped VMEM limit on v5e / v6e / v7x.
_TARGET_BLOCK_BYTES = 2 * 1024 * 1024


def _min_sublane(dtype):
    # Minimum second-to-last block extent per dtype packing:
    # 4-byte -> 8 rows, 2-byte (bf16) -> 16, 1-byte (int8/fp8) -> 32.
    return {4: 8, 2: 16, 1: 32}.get(jnp.dtype(dtype).itemsize, 8)


def _choose_layout(n, itemsize, min_sub):
    """Pick a lane-dense (rows, lanes, block_rows) layout for a flat size `n`,
    or return None if the size cannot be tiled without padding."""
    for lanes in _LANE_CANDIDATES:
        if n % lanes:
            continue
        rows = n // lanes
        if rows * lanes * itemsize <= _TARGET_BLOCK_BYTES:
            # Whole array fits in a single full-extent block (always legal).
            return rows, lanes, rows
        if rows % min_sub:
            continue
        target_rows = max(min_sub, _TARGET_BLOCK_BYTES // (lanes * itemsize))
        block_rows = (min(target_rows, rows) // min_sub) * min_sub
        while block_rows > min_sub and rows % block_rows:
            block_rows -= min_sub
        if rows % block_rows == 0:
            return rows, lanes, block_rows
    return None


def _run_elementwise(kernel_fn, x):
    """Run an elementwise Pallas kernel over an arbitrarily-shaped array."""
    orig_shape = x.shape
    dtype = x.dtype
    n = x.size
    if n == 0:
        return x

    itemsize = jnp.dtype(dtype).itemsize
    min_sub = _min_sublane(dtype)
    flat = x.reshape(-1)

    layout = _choose_layout(n, itemsize, min_sub)
    padded = False
    if layout is None:
        # Rare ragged fallback (flat size not a multiple of 128): pad up to one
        # (min_sub, 128) tile multiple.  Padding with ones is benign for both
        # square and safe_log.
        # TODO(synk): handle ragged tails with masked in-kernel stores instead
        # of this host-side pad for fully general expression_fns.
        lanes = 128
        tile = min_sub * lanes
        n_pad = pl.cdiv(n, tile) * tile
        flat = jnp.concatenate([flat, jnp.ones((n_pad - n,), dtype=dtype)])
        rows = n_pad // lanes
        target_rows = max(min_sub, _TARGET_BLOCK_BYTES // (lanes * itemsize))
        block_rows = min(rows, (target_rows // min_sub) * min_sub)
        while block_rows > min_sub and rows % block_rows:
            block_rows -= min_sub
        padded = True
    else:
        rows, lanes, block_rows = layout

    x2d = flat.reshape(rows, lanes)
    grid = (rows // block_rows,)

    out2d = pl.pallas_call(
        kernel_fn,
        out_shape=jax.ShapeDtypeStruct((rows, lanes), dtype),
        grid=grid,
        in_specs=[pl.BlockSpec((block_rows, lanes), lambda i: (i, 0))],
        out_specs=pl.BlockSpec((block_rows, lanes), lambda i: (i, 0)),
        compiler_params=pltpu.CompilerParams(
            dimension_semantics=("parallel",),
        ),
    )(x2d)

    if padded:
        return out2d.reshape(-1)[:n].reshape(orig_shape)
    return out2d.reshape(orig_shape)


# ---------------------------------------------------------------------------
# Pallas-backed expression functions (the callables Expression wraps)
# ---------------------------------------------------------------------------

def square(x):
    """Elementwise square, computed in a Pallas TPU kernel."""
    return _run_elementwise(_square_kernel, x)


def safe_log(x, eps=1e-6):
    """log(max(x, eps)), computed in a Pallas TPU kernel."""
    # Note: eps is baked in at trace time; different eps values retrace.
    return _run_elementwise(functools.partial(_safe_log_kernel, eps=eps), x)


def square_then_safe_log(x, eps=1e-6):
    """Fused x -> log(max(x*x, eps)) in a single Pallas kernel (half the HBM
    traffic of square followed by safe_log)."""
    return _run_elementwise(
        functools.partial(_square_safe_log_kernel, eps=eps), x
    )


# ---------------------------------------------------------------------------
# Expression module (JAX equivalent of the PyTorch nn.Module)
# ---------------------------------------------------------------------------

class Expression:
    """Compute given expression on forward pass (JAX / Pallas version)."""

    def __init__(self, expression_fn):
        self.expression_fn = expression_fn

    def __call__(self, *x):
        return self.expression_fn(*x)

    def __repr__(self):
        if hasattr(self.expression_fn, "func") and hasattr(
            self.expression_fn, "keywords"
        ):
            expression_str = "{:s} {:s}".format(
                self.expression_fn.func.__name__, str(self.expression_fn.keywords)
            )
        elif hasattr(self.expression_fn, "__name__"):
            expression_str = self.expression_fn.__name__
        else:
            expression_str = repr(self.expression_fn)
        return self.__class__.__name__ + "(expression=%s) " % expression_str


# ---------------------------------------------------------------------------
# Demo / self-test
# ---------------------------------------------------------------------------

if __name__ == "__main__":
    key = jax.random.PRNGKey(0)
    # layout: NCHW — batch=2, channels=4, H=16, W=16 (as in the PyTorch input)
    x = jax.random.normal(key, (2, 4, 16, 16), dtype=jnp.float32)

    # Canonical ShallowFBCSPNet usage from the BCI_IV example:
    # Expression(square) ... Expression(safe_log).  Also test the fused form.
    expr_square = Expression(square)
    expr_safelog = Expression(functools.partial(safe_log, eps=1e-6))
    expr_fused = Expression(functools.partial(square_then_safe_log, eps=1e-6))

    y_sq = expr_square(x)
    y_two = expr_safelog(y_sq)
    y_fused = expr_fused(x)
    jax.block_until_ready((y_sq, y_two, y_fused))

    # Reference check in plain JAX.
    ref_sq = x * x
    ref = jnp.log(jnp.maximum(ref_sq, 1e-6))
    assert y_fused.shape == x.shape and y_fused.dtype == x.dtype
    assert jnp.allclose(y_sq, ref_sq, atol=1e-5, rtol=1e-5)
    assert jnp.allclose(y_two, ref, atol=1e-5, rtol=1e-5)
    assert jnp.allclose(y_fused, ref, atol=1e-5, rtol=1e-5)

    # Exercise the ragged fallback path (flat size not a multiple of 128).
    x_ragged = jax.random.normal(
        jax.random.PRNGKey(1), (3, 5, 7, 11), dtype=jnp.float32
    )
    y_ragged = Expression(square)(x_ragged)
    jax.block_until_ready(y_ragged)
    assert jnp.allclose(y_ragged, x_ragged * x_ragged, atol=1e-5, rtol=1e-5)

    print("KERNEL_OK")
</pallas_src>

<mosaic_0001>
module attributes {stable_mosaic.version = 11 : i64} {
  func.func @_square_kernel(%arg0: i32, %arg1: memref<1x2048xf32, #tpu.memory_space<vmem>>, %arg2: memref<1x2048xf32, #tpu.memory_space<vmem>>) attributes {dimension_semantics = [#tpu.dimension_semantics<parallel>], iteration_bounds = array<i64: 1>, scalar_prefetch = 0 : i64, scratch_operands = 0 : i64, tpu.core_type = #tpu.core_type<tc>, window_params = [{transform_indices = @transform_0, window_bounds = array<i64: 1, 2048>}, {transform_indices = @transform_1, window_bounds = array<i64: 1, 2048>}]} {
    %c0 = arith.constant 0 : index
    %c0_0 = arith.constant 0 : index
    %0 = vector.load %arg1[%c0, %c0_0] : memref<1x2048xf32, #tpu.memory_space<vmem>>, vector<1x2048xf32>
    %1 = arith.mulf %0, %0 : vector<1x2048xf32>
    %c0_1 = arith.constant 0 : index
    %c0_2 = arith.constant 0 : index
    %2 = vector.load %arg2[%c0_1, %c0_2] : memref<1x2048xf32, #tpu.memory_space<vmem>>, vector<1x2048xf32>
    tpu.vector_store %arg2[%c0_1, %c0_2], %1 {strides = array<i32>} : memref<1x2048xf32, #tpu.memory_space<vmem>>, vector<1x2048xf32>,
    return
  }
  func.func @transform_0(%arg0: i32) -> (i32, i32) {
    %c0_i32 = arith.constant 0 : i32
    %c0_i32_0 = arith.constant 0 : i32
    return %arg0, %c0_i32 : i32, i32
  }
  func.func @transform_1(%arg0: i32) -> (i32, i32) {
    %c0_i32 = arith.constant 0 : i32
    %c0_i32_0 = arith.constant 0 : i32
    return %arg0, %c0_i32 : i32, i32
  }
}

</mosaic_0001>

<llo_original>
// kernel: tpu_custom_call.1
$region0: #{tpu_custom_call.1}
  #allocation0 [shape = 'u32[]', space=smem, size = 0x4, offset = 0x4, fixed_abs, tag = 'smem constant byte address 0x4 - core index']
  #allocation1 [shape = 'u32[72,128]{1,0:T(1,128)}', space=vmem, size = 0x9000, scoped, tag = 'internal scratch']
  %s0 = inlined_call_operand.hbm [shape: f32[1,2048], index: 0, kind: input, shape index: {}]
  %s1 = inlined_call_operand.hbm [shape: f32[1,2048], index: 1, kind: output, shape index: {}]
  %s2 = sld [smem:[#allocation0]]
  $region18: #{tpu_custom_call.1} parent=0
    _
  %s4 = ssub.s32 1, %s2
  %s5 = scalar_select 0, %s4, %s2
  $region1: #{tpu_custom_call.1} parent=0
    #allocation2 [shape = 'u8[8192]{0}', space=vmem, size = 0x2000, scoped, tag = 'input window, operand 0, single buffered']
    #allocation3 [shape = 's32[1]{0}', space=sflag, size = 0x4, scoped, tag = 'scoped memory for tpu_custom_call.1']
    #allocation4 [shape = 's32[1]{0}', space=sflag, size = 0x4, scoped, tag = 'scoped memory for tpu_custom_call.1']
    #allocation5 [shape = 'u8[8192]{0}', space=vmem, size = 0x2000, scoped, tag = 'output window, operand 0, single buffered']
    %6 = vsyncpa [#allocation3], 0
    %7 = vsyncpa [#allocation4], 0
    // Predicated region
    $region2: #{tpu_custom_call.1} parent=1 // pred_check
      _
    $region3: #{tpu_custom_call.1} parent=1 // pred_check_branch
      %9 = sbr.rel (0) target = $region5
    $region4: #{tpu_custom_call.1} parent=1 // pred_region
      %11 = vsyncadd [#allocation3], 0
      %s13 = sshll.u32 %s0, 4
      %s14 = int_to_ptr.hbm [resolvable:$true] %s13
      %s15 = sshll.u32 [#allocation2], 4
      %s16 = int_to_ptr.vmem [resolvable:$true] %s15
      %18 = dma.hbm_to_vmem [thread:$0]  %s14, 256, %s16, [#allocation3]
    $region5: #{tpu_custom_call.1} parent=1 // pred_fallthru
      _
    // Predicated region
    $region6: #{tpu_custom_call.1} parent=1 // pred_check
      _
    $region7: #{tpu_custom_call.1} parent=1 // pred_check_branch
      %20 = sbr.rel (0) target = $region9
    $region8: #{tpu_custom_call.1} parent=1 // pred_region
      %22 = dma.done [#allocation3], 256
    $region9: #{tpu_custom_call.1} parent=1 // pred_fallthru
      _
    %v23 = vld [vmem:[#allocation2] sm:$0xff]
    %v24 = vld [vmem:[#allocation2 + $0x8] sm:$0xff]
    %v25 = vmul.f32 %v23, %v23
    %v26 = vmul.f32 %v24, %v24
    %27 = vst [vmem:[#allocation5] sm:$0xff] %v25
    %28 = vst [vmem:[#allocation5 + $0x8] sm:$0xff] %v26
    // Predicated region
    $region10: #{tpu_custom_call.1} parent=1 // pred_check
      _
    $region11: #{tpu_custom_call.1} parent=1 // pred_check_branch
      %30 = sbr.rel (0) target = $region13
    $region12: #{tpu_custom_call.1} parent=1 // pred_region
      %32 = vsyncadd [#allocation4], 0
      %s34 = sshll.u32 [#allocation5], 4
      %s35 = int_to_ptr.vmem [resolvable:$true] %s34
      %s36 = sshll.u32 %s1, 4
      %s37 = int_to_ptr.hbm [resolvable:$true] %s36
      %39 = dma.vmem_to_hbm [thread:$0]  %s35, 256, %s37, [#allocation4]
    $region13: #{tpu_custom_call.1} parent=1 // pred_fallthru
      _
    // Predicated region
    $region14: #{tpu_custom_call.1} parent=1 // pred_check
      _
    $region15: #{tpu_custom_call.1} parent=1 // pred_check_branch
      %41 = sbr.rel (0) target = $region17
    $region16: #{tpu_custom_call.1} parent=1 // pred_region
      %43 = dma.done [#allocation4], 256
    $region17: #{tpu_custom_call.1} parent=1 // pred_fallthru
      _
    %44 = vsyncpa [#allocation3], 1
    %45 = vsyncpa [#allocation4], 1

</llo_original>
